<compile_context>
chip_gen: v7x
topology: tpu7x:2x2x1
jax: 0.10.0
libtpu: 0.0.40
codegen_flags: <defaults>
</compile_context>

<pallas_src>
import math

import jax
import jax.numpy as jnp
from jax.experimental import pallas as pl
from jax.experimental.pallas import tpu as pltpu


def _dropout_tied_kernel(x_ref, m_ref, o_ref):
    """One grid step: o = x * mask_scaled, mask broadcast across the length axis.

    x_ref: (row_tile, tile_L)   input slab
    m_ref: (row_tile, 1)        per-row scaled mask (0 or 1/(1-p)), f32
    o_ref: (row_tile, tile_L)   output slab
    """
    o_ref[...] = (x_ref[...] * m_ref[...]).astype(o_ref.dtype)


def _round_up(x, m):
    return (x + m - 1) // m * m


# Sublane packing per element size: 32-bit -> 8 rows/vreg, 16-bit -> 16, 8-bit -> 32.
_SUBLANE = {1: 32, 2: 16, 4: 8, 8: 8}


def _choose_tiles(rows, L, dtype, target_bytes=4 << 20):
    """Pick (row_tile, tile_L): ~4 MiB lane-dense blocks, sublane-aligned per dtype.

    Big blocks keep the kernel at the HBM roofline (per-grid-step overhead ~0.35 us);
    4 MiB blocks double-buffered for in+out are ~16 MiB, plus slack we request
    explicitly via vmem_limit_bytes, safely inside every generation's VMEM.
    """
    itemsize = jnp.dtype(dtype).itemsize
    sublane = _SUBLANE.get(itemsize, 8)

    # Lane tile: multiple of 128; cap it so even a minimal-sublane slab fits the
    # target (long-sequence case -> grid also splits along L, VMEM stays bounded).
    l_cap = max(128, (target_bytes // (sublane * itemsize)) // 128 * 128)
    tile_l = min(_round_up(max(L, 1), 128), l_cap)

    # Rows per block: fill up to target_bytes, rounded to the dtype's sublane packing
    # so loads/stores stay unmasked and dense.
    row_tile = max(sublane, (target_bytes // (tile_l * itemsize)) // sublane * sublane)
    row_tile = min(row_tile, _round_up(rows, sublane))

    # v7x has 2 TensorCores per chip; a (1,1) grid would idle one of them, so split
    # the row axis when the whole array fits a single block (no-op on v5e/v6e).
    if row_tile >= rows and tile_l >= L and rows > sublane:
        row_tile = _round_up(pl.cdiv(rows, 2), sublane)

    return row_tile, tile_l


def dropout_nd(x, *, p=0.5, key=None, tie=True, transposed=True, training=True):
    """Pallas implementation of DropoutNd.forward (training mode)."""
    if not (0.0 <= p < 1.0):
        raise ValueError(f"dropout probability has to be in [0, 1), got {p}")
    if not training or p == 0.0:
        return x
    # TODO(synk): untied (tie=False) and transposed=False variants not implemented;
    #             module defaults are tie=True, transposed=True.
    assert tie and transposed
    if key is None:
        # TODO(synk): PyTorch uses a stateful RNG; callers should pass a fresh key
        #             each step or the mask repeats.
        key = jax.random.PRNGKey(0)

    B, C = x.shape[:2]
    L = math.prod(x.shape[2:]) if x.ndim > 2 else 1
    rows = B * C
    x2 = x.reshape(rows, L)

    keep_prob = 1.0 - p
    # Tied mask: one draw per (batch, dim) row, folded with the 1/(1-p) rescale so the
    # kernel does a single multiply per element.  Kept in f32 for exact scaling.
    u = jax.random.uniform(key, (rows, 1), dtype=jnp.float32)
    mask_scaled = jnp.where(u < keep_prob, jnp.float32(1.0 / keep_prob), jnp.float32(0.0))

    row_tile, tile_l = _choose_tiles(rows, L, x.dtype)
    grid = (pl.cdiv(rows, row_tile), pl.cdiv(L, tile_l))

    # Explicit VMEM budget: double-buffered input + output blocks + mask + slack.
    block_bytes = row_tile * tile_l * jnp.dtype(x.dtype).itemsize
    vmem_limit = int(4 * block_bytes + (4 << 20))

    out = pl.pallas_call(
        _dropout_tied_kernel,
        out_shape=jax.ShapeDtypeStruct((rows, L), x.dtype),
        grid=grid,
        in_specs=[
            pl.BlockSpec((row_tile, tile_l), lambda i, j: (i, j)),
            # Mask index is invariant along j (the last / fastest grid axis), so its
            # DMA is elided across consecutive steps and only the x/out stream flows.
            pl.BlockSpec((row_tile, 1), lambda i, j: (i, 0)),
        ],
        out_specs=pl.BlockSpec((row_tile, tile_l), lambda i, j: (i, j)),
        compiler_params=pltpu.CompilerParams(
            dimension_semantics=("parallel", "parallel"),
            vmem_limit_bytes=vmem_limit,
        ),
    )(x2, mask_scaled)

    return out.reshape(x.shape)


def _check_tied(x, y, p, rtol=1e-5, atol=1e-5):
    import numpy as np
    B, C = x.shape[:2]
    L = math.prod(x.shape[2:]) if x.ndim > 2 else 1
    xf = np.asarray(x, dtype=np.float32).reshape(B * C, L)
    yf = np.asarray(y, dtype=np.float32).reshape(B * C, L)
    scale = 1.0 / (1.0 - p)
    for r in range(B * C):
        zero_row = np.allclose(yf[r], 0.0, atol=atol)
        scaled_row = np.allclose(yf[r], xf[r] * scale, rtol=rtol, atol=atol)
        assert zero_row or scaled_row, f"row {r} is neither dropped nor scaled"


if __name__ == "__main__":
    key = jax.random.PRNGKey(0)
    k_data, k_mask, k_data2, k_mask2, k_data3, k_mask3 = jax.random.split(key, 6)

    p = 0.5

    # Main case: f32, aligned shapes.
    B, C, H, W = 2, 4, 16, 16
    x = jax.random.normal(k_data, (B, C, H, W), dtype=jnp.float32)
    y = jax.block_until_ready(dropout_nd(x, p=p, key=k_mask, training=True))
    _check_tied(x, y, p)

    # bf16 with non-aligned rows / length (exercises partial-boundary blocks,
    # no wrapper padding involved any more).
    x2 = jax.random.normal(k_data2, (2, 3, 5, 7), dtype=jnp.bfloat16)
    y2 = jax.block_until_ready(dropout_nd(x2, p=p, key=k_mask2, training=True))
    _check_tied(x2, y2, p, rtol=2e-2, atol=2e-2)

    # A shape that is unaligned on both axes and large enough to split rows
    # (also checks the two-core grid split path).
    x3 = jax.random.normal(k_data3, (3, 7, 9, 20), dtype=jnp.float32)
    y3 = jax.block_until_ready(dropout_nd(x3, p=p, key=k_mask3, training=True))
    _check_tied(x3, y3, p)

    # Eval mode is identity.
    y4 = jax.block_until_ready(dropout_nd(x, p=p, key=k_mask, training=False))
    import numpy as np
    assert np.allclose(np.asarray(y4), np.asarray(x))

    print("KERNEL_OK")
</pallas_src>

<mosaic_0001>
module attributes {stable_mosaic.version = 11 : i64} {
  func.func @_dropout_tied_kernel(%arg0: i32, %arg1: i32, %arg2: memref<8x256xf32, #tpu.memory_space<vmem>>, %arg3: memref<8x1xf32, #tpu.memory_space<vmem>>, %arg4: memref<8x256xf32, #tpu.memory_space<vmem>>) attributes {dimension_semantics = [#tpu.dimension_semantics<parallel>, #tpu.dimension_semantics<parallel>], iteration_bounds = array<i64: 1, 1>, scalar_prefetch = 0 : i64, scratch_operands = 0 : i64, tpu.core_type = #tpu.core_type<tc>, window_params = [{transform_indices = @transform_0, window_bounds = array<i64: 8, 256>}, {transform_indices = @transform_1, window_bounds = array<i64: 8, 1>}, {transform_indices = @transform_2, window_bounds = array<i64: 8, 256>}]} {
    %c0 = arith.constant 0 : index
    %c0_0 = arith.constant 0 : index
    %0 = vector.load %arg2[%c0, %c0_0] : memref<8x256xf32, #tpu.memory_space<vmem>>, vector<8x256xf32>
    %c0_1 = arith.constant 0 : index
    %c0_2 = arith.constant 0 : index
    %1 = vector.load %arg3[%c0_1, %c0_2] : memref<8x1xf32, #tpu.memory_space<vmem>>, vector<8x1xf32>
    %2 = vector.broadcast %1 : vector<8x1xf32> to vector<8x256xf32>
    %3 = arith.mulf %0, %2 : vector<8x256xf32>
    %c0_3 = arith.constant 0 : index
    %c0_4 = arith.constant 0 : index
    %4 = vector.load %arg4[%c0_3, %c0_4] : memref<8x256xf32, #tpu.memory_space<vmem>>, vector<8x256xf32>
    tpu.vector_store %arg4[%c0_3, %c0_4], %3 {strides = array<i32>} : memref<8x256xf32, #tpu.memory_space<vmem>>, vector<8x256xf32>,
    return
  }
  func.func @transform_0(%arg0: i32, %arg1: i32) -> (i32, i32) {
    %c0_i32 = arith.constant 0 : i32
    return %arg0, %arg1 : i32, i32
  }
  func.func @transform_1(%arg0: i32, %arg1: i32) -> (i32, i32) {
    %c0_i32 = arith.constant 0 : i32
    %c0_i32_0 = arith.constant 0 : i32
    return %arg0, %c0_i32 : i32, i32
  }
  func.func @transform_2(%arg0: i32, %arg1: i32) -> (i32, i32) {
    %c0_i32 = arith.constant 0 : i32
    return %arg0, %arg1 : i32, i32
  }
}

</mosaic_0001>

<llo_original>
// kernel: tpu_custom_call.1
$region0: #{tpu_custom_call.1}
  #allocation0 [shape = 'u32[]', space=smem, size = 0x4, offset = 0x4, fixed_abs, tag = 'smem constant byte address 0x4 - core index']
  #allocation1 [shape = 'u32[144,128]{1,0:T(1,128)}', space=vmem, size = 0x12000, scoped, tag = 'internal scratch']
  %s0 = inlined_call_operand.hbm [shape: f32[8,256], index: 0, kind: input, shape index: {}]
  %s1 = inlined_call_operand.vmem [shape: f32[8,1], index: 1, kind: input, shape index: {}]
  %s2 = inlined_call_operand.hbm [shape: f32[8,256], index: 2, kind: output, shape index: {}]
  %s3 = sld [smem:[#allocation0]]
  $region22: #{tpu_custom_call.1} parent=0
    _
  %s5 = ssub.s32 1, %s3
  %s6 = scalar_select 0, %s5, %s3
  $region1: #{tpu_custom_call.1} parent=0
    #allocation2 [shape = 'u8[8192]{0}', space=vmem, size = 0x2000, scoped, tag = 'input window, operand 0, single buffered']
    #allocation3 [shape = 's32[1]{0}', space=sflag, size = 0x4, scoped, tag = 'scoped memory for tpu_custom_call.1']
    #allocation4 [shape = 's32[1]{0}', space=sflag, size = 0x4, scoped, tag = 'scoped memory for tpu_custom_call.1']
    #allocation5 [shape = 'u8[8192]{0}', space=vmem, size = 0x2000, scoped, tag = 'output window, operand 0, single buffered']
    %7 = vsyncpa [#allocation3], 0
    %8 = vsyncpa [#allocation4], 0
    // Predicated region
    $region2: #{tpu_custom_call.1} parent=1 // pred_check
      _
    $region3: #{tpu_custom_call.1} parent=1 // pred_check_branch
      %10 = sbr.rel (0) target = $region5
    $region4: #{tpu_custom_call.1} parent=1 // pred_region
      %s12 = ssub.s32 256, 256
      %13 = vsyncadd [#allocation3], %s12
      %s15 = sshll.u32 [#allocation2], 4
      %s16 = int_to_ptr.vmem [resolvable:$true] %s15
      %18 = dma.hbm_to_vmem [thread:$0]  %s0, 256, %s16, [#allocation3]
    $region5: #{tpu_custom_call.1} parent=1 // pred_fallthru
      _
    // Predicated region
    $region6: #{tpu_custom_call.1} parent=1 // pred_check
      _
    $region7: #{tpu_custom_call.1} parent=1 // pred_check_branch
      %20 = sbr.rel (0) target = $region9
    $region8: #{tpu_custom_call.1} parent=1 // pred_region
      _
    $region9: #{tpu_custom_call.1} parent=1 // pred_fallthru
      _
    // Predicated region
    $region10: #{tpu_custom_call.1} parent=1 // pred_check
      _
    $region11: #{tpu_custom_call.1} parent=1 // pred_check_branch
      %22 = sbr.rel (0) target = $region13
    $region12: #{tpu_custom_call.1} parent=1 // pred_region
      %23 = dma.done [#allocation3], 256
    $region13: #{tpu_custom_call.1} parent=1 // pred_fallthru
      _
    %v24 = vld [vmem:[#allocation2] sm:$0xff]
    %v25 = vld [vmem:[#allocation2 + $0x8] sm:$0xff]
    %v26 = vld [vmem:[%s1] sm:$0xff]
    %28 = vset.pattern.permute.xlu0 0
    %29 = vperm.xlu0 %28, %v26
    %v30 = vpop.permute.xlu0 %29
    %v32 = vmul.f32 %v24, %v30
    %v33 = vmul.f32 %v25, %v30
    %34 = vst [vmem:[#allocation5] sm:$0xff] %v32
    %35 = vst [vmem:[#allocation5 + $0x8] sm:$0xff] %v33
    // Predicated region
    $region14: #{tpu_custom_call.1} parent=1 // pred_check
      _
    $region15: #{tpu_custom_call.1} parent=1 // pred_check_branch
      %37 = sbr.rel (0) target = $region17
    $region16: #{tpu_custom_call.1} parent=1 // pred_region
      %s39 = ssub.s32 256, 256
      %40 = vsyncadd [#allocation4], %s39
      %s42 = sshll.u32 [#allocation5], 4
      %s43 = int_to_ptr.vmem [resolvable:$true] %s42
      %45 = dma.vmem_to_hbm [thread:$0]  %s43, 256, %s2, [#allocation4]
    $region17: #{tpu_custom_call.1} parent=1 // pred_fallthru
      _
    // Predicated region
    $region18: #{tpu_custom_call.1} parent=1 // pred_check
      _
    $region19: #{tpu_custom_call.1} parent=1 // pred_check_branch
      %47 = sbr.rel (0) target = $region21
    $region20: #{tpu_custom_call.1} parent=1 // pred_region
      %48 = dma.done [#allocation4], 256
    $region21: #{tpu_custom_call.1} parent=1 // pred_fallthru
      _
    %49 = vsyncpa [#allocation3], 1
    %50 = vsyncpa [#allocation4], 1

</llo_original>
